<compile_context>
chip_gen: v6e
topology: v6e:2x2x1
jax: 0.10.0
libtpu: 0.0.40
codegen_flags: <defaults>
</compile_context>

<pallas_src>
import functools

import jax
import jax.numpy as jnp
from jax.experimental import pallas as pl
from jax.experimental.pallas import tpu as pltpu

_MiB = 1024 * 1024


def _rmsnorm_kernel(x_ref, w_ref, o_ref, *, eps):
    # Pass 1: reduction in float32 (matches hidden_states.to(torch.float32)).
    x32 = x_ref[...].astype(jnp.float32)
    var = jnp.mean(x32 * x32, axis=-1, keepdims=True)
    inv = jax.lax.rsqrt(var + eps)
    # Pass 2: stream the normalize/scale from the VMEM-resident input block
    # again rather than keeping the full f32 copy live across the reduction
    # (lower peak scratch / vreg pressure; kernel is HBM-bound anyway).
    normed = (x_ref[...].astype(jnp.float32) * inv).astype(x_ref.dtype)
    # torch: weight * hidden_states.to(input_dtype)  (torch type promotion)
    o_ref[...] = (w_ref[...] * normed).astype(o_ref.dtype)


def _round_up(x, m):
    return ((x + m - 1) // m) * m


def _chip_params():
    """(tensorcores_per_chip, vmem_limit_bytes) for the local TPU generation."""
    kind = ""
    num_cores = 1
    physical_vmem = 128 * _MiB  # v5e / v6e
    try:
        dev = jax.devices()[0]
        kind = (getattr(dev, "device_kind", "") or "").lower()
        num_cores = int(getattr(dev, "num_cores", 1) or 1)
    except Exception:
        pass
    try:
        physical_vmem = int(pltpu.get_tpu_info().vmem_capacity_bytes)
    except Exception:
        if "v7" in kind:
            physical_vmem = 64 * _MiB
    if "v7" in kind:
        num_cores = max(num_cores, 2)  # 2 TensorCores share the grid on v7x
    # Leave headroom for compiler-internal scratch / weight block / semaphores,
    # and never ask for more than 64 MiB even on 128 MiB parts.
    vmem_limit = min((physical_vmem * 3) // 4, 64 * _MiB)
    return max(1, num_cores), int(vmem_limit)


def _pick_block_rows(rows, hidden, in_bytes, out_bytes, *, num_cores,
                     vmem_budget_bytes, target_block_in_bytes=8 * _MiB):
    """Largest dtype-aligned row tile such that
         2 * block * hidden * (in_bytes + out_bytes)   (double-buffered I/O)
       + 2 * block * hidden * 4                        (in-kernel f32 temporaries)
    stays within the chip's VMEM budget, targeting ~target_block_in_bytes of
    input per block to amortize the ~0.35 us per-grid-step overhead."""
    # Sublane packing: f32 -> 8-row native tile, bf16 -> 16, int8/fp8 -> 32.
    align = max(8, 32 // max(1, min(4, in_bytes)))

    io_per_row = 2 * hidden * (in_bytes + out_bytes)   # double-buffered in + out
    scratch_per_row = 2 * hidden * 4                   # f32 temporaries (single-buffered)
    per_row = io_per_row + scratch_per_row

    fit = max(align, vmem_budget_bytes // max(1, per_row))
    target = max(align, target_block_in_bytes // max(1, hidden * in_bytes))
    block = min(fit, target)
    # Never exceed what the (padded) input actually needs.
    block = min(block, _round_up(rows, align))
    # Snap down to the alignment.
    block = max(align, (block // align) * align)

    # Megacore (v7x): make the grid length a multiple of the core count so both
    # TensorCores see the same HBM traffic (odd step counts leave one core with
    # an extra step on a purely bandwidth-bound op).
    if num_cores > 1:
        g = pl.cdiv(rows, block)
        if g > 1 and g % num_cores != 0:
            g_even = _round_up(g, num_cores)
            block_even = max(align,
                             _round_up(pl.cdiv(rows, g_even), align))
            if block_even <= block:  # smaller block always fits the budget
                block = block_even
    return block


def qwen2_rmsnorm(hidden_states, weight, eps=1e-6, *,
                  block_rows=None, out_dtype=None):
    """RMSNorm over the last axis of `hidden_states`.

    hidden_states: (..., hidden)
    weight:        (hidden,)
    block_rows:    optional tuning knob; auto-sized from dtype + chip VMEM.
    out_dtype:     optional override (default = torch promotion of
                   weight * x.to(input_dtype)); e.g. pass bf16 with f32 weights
                   to avoid doubling the write traffic (changes numerics).
    """
    orig_shape = hidden_states.shape
    hidden = orig_shape[-1]
    assert weight.shape == (hidden,)

    x2d = hidden_states.reshape(-1, hidden)
    rows = x2d.shape[0]
    w2d = weight.reshape(1, hidden)

    if out_dtype is None:
        out_dtype = jnp.promote_types(weight.dtype, hidden_states.dtype)
    in_bytes = jnp.dtype(hidden_states.dtype).itemsize
    out_bytes = jnp.dtype(out_dtype).itemsize

    num_cores, vmem_limit_bytes = _chip_params()
    if block_rows is None:
        block_rows = _pick_block_rows(
            rows, hidden, in_bytes, out_bytes,
            num_cores=num_cores, vmem_budget_bytes=vmem_limit_bytes)

    grid = (pl.cdiv(rows, block_rows),)  # partial last block handled by Pallas

    out = pl.pallas_call(
        functools.partial(_rmsnorm_kernel, eps=eps),
        out_shape=jax.ShapeDtypeStruct((rows, hidden), out_dtype),
        grid_spec=pltpu.PrefetchScalarGridSpec(
            num_scalar_prefetch=0,
            grid=grid,
            in_specs=[
                pl.BlockSpec((block_rows, hidden), lambda i: (i, 0)),
                pl.BlockSpec((1, hidden), lambda i: (0, 0)),
            ],
            out_specs=pl.BlockSpec((block_rows, hidden), lambda i: (i, 0)),
        ),
        compiler_params=pltpu.CompilerParams(
            dimension_semantics=("parallel",),
            vmem_limit_bytes=vmem_limit_bytes,
        ),
    )(x2d, w2d)

    return out.reshape(orig_shape[:-1] + (hidden,))


def qwen2_rmsnorm_ref(hidden_states, weight, eps=1e-6):
    """Pure-JAX reference mirroring the PyTorch forward exactly."""
    input_dtype = hidden_states.dtype
    x = hidden_states.astype(jnp.float32)
    var = jnp.mean(x * x, axis=-1, keepdims=True)
    x = x * jax.lax.rsqrt(var + eps)
    return weight * x.astype(input_dtype)


if __name__ == "__main__":
    key = jax.random.PRNGKey(0)
    eps = 1e-6

    # --- main check: f32, shapes consistent with the module ---
    batch, seq, hidden = 2, 8, 32
    k0, k1, k2 = jax.random.split(key, 3)
    x = jax.random.normal(k0, (batch, seq, hidden), dtype=jnp.float32)
    weight = jnp.ones((hidden,), dtype=jnp.float32)

    out = jax.block_until_ready(qwen2_rmsnorm(x, weight, eps))
    ref = qwen2_rmsnorm_ref(x, weight, eps)
    assert out.shape == ref.shape and out.dtype == ref.dtype
    assert jnp.allclose(out, ref, atol=1e-5, rtol=1e-5)

    # --- ragged rows (rows % block_rows != 0) exercises the masked tail block ---
    xr = jax.random.normal(k1, (3, 5, hidden), dtype=jnp.float32)
    out_r = jax.block_until_ready(qwen2_rmsnorm(xr, weight, eps))
    ref_r = qwen2_rmsnorm_ref(xr, weight, eps)
    assert out_r.shape == ref_r.shape and out_r.dtype == ref_r.dtype
    assert jnp.allclose(out_r, ref_r, atol=1e-5, rtol=1e-5)

    # --- bf16 path exercises dtype-aware (16-row) tile alignment ---
    xb = jax.random.normal(k2, (batch, seq, hidden),
                           dtype=jnp.float32).astype(jnp.bfloat16)
    wb = jnp.ones((hidden,), dtype=jnp.bfloat16)
    out_b = jax.block_until_ready(qwen2_rmsnorm(xb, wb, eps))
    ref_b = qwen2_rmsnorm_ref(xb, wb, eps)
    assert out_b.shape == ref_b.shape and out_b.dtype == ref_b.dtype
    assert jnp.allclose(out_b.astype(jnp.float32), ref_b.astype(jnp.float32),
                        atol=1e-2, rtol=1e-2)

    print("KERNEL_OK")
</pallas_src>

<mosaic_0001>
module attributes {stable_mosaic.version = 11 : i64} {
  func.func @_rmsnorm_kernel(%arg0: i32, %arg1: memref<16x32xf32, #tpu.memory_space<vmem>>, %arg2: memref<1x32xf32, #tpu.memory_space<vmem>>, %arg3: memref<16x32xf32, #tpu.memory_space<vmem>>) attributes {dimension_semantics = [#tpu.dimension_semantics<parallel>], iteration_bounds = array<i64: 1>, scalar_prefetch = 0 : i64, scratch_operands = 0 : i64, tpu.core_type = #tpu.core_type<tc>, window_params = [{transform_indices = @transform_0, window_bounds = array<i64: 16, 32>}, {pipeline_mode = #tpu.pipeline_mode<synchronous>, transform_indices = @transform_1, window_bounds = array<i64: 1, 32>}, {transform_indices = @transform_2, window_bounds = array<i64: 16, 32>}]} {
    %c0 = arith.constant 0 : index
    %c0_0 = arith.constant 0 : index
    %0 = vector.load %arg1[%c0, %c0_0] : memref<16x32xf32, #tpu.memory_space<vmem>>, vector<16x32xf32>
    %1 = arith.mulf %0, %0 : vector<16x32xf32>
    %cst = arith.constant dense<0.000000e+00> : vector<16xf32>
    %2 = vector.multi_reduction <add>, %1, %cst [1] : vector<16x32xf32> to vector<16xf32>
    %3 = vector.shape_cast %2 : vector<16xf32> to vector<16x1xf32>
    %cst_1 = arith.constant 3.200000e+01 : f32
    %4 = vector.broadcast %cst_1 : f32 to vector<16x1xf32>
    %5 = arith.divf %3, %4 : vector<16x1xf32>
    %cst_2 = arith.constant 9.99999997E-7 : f32
    %6 = vector.broadcast %cst_2 : f32 to vector<16x1xf32>
    %7 = arith.addf %5, %6 : vector<16x1xf32>
    %8 = math.rsqrt %7 : vector<16x1xf32>
    %c0_3 = arith.constant 0 : index
    %c0_4 = arith.constant 0 : index
    %9 = vector.load %arg1[%c0_3, %c0_4] : memref<16x32xf32, #tpu.memory_space<vmem>>, vector<16x32xf32>
    %10 = vector.broadcast %8 : vector<16x1xf32> to vector<16x32xf32>
    %11 = arith.mulf %9, %10 : vector<16x32xf32>
    %c0_5 = arith.constant 0 : index
    %c0_6 = arith.constant 0 : index
    %12 = vector.load %arg2[%c0_5, %c0_6] : memref<1x32xf32, #tpu.memory_space<vmem>>, vector<1x32xf32>
    %13 = vector.broadcast %12 : vector<1x32xf32> to vector<16x32xf32>
    %14 = arith.mulf %13, %11 : vector<16x32xf32>
    %c0_7 = arith.constant 0 : index
    %c0_8 = arith.constant 0 : index
    %15 = vector.load %arg3[%c0_7, %c0_8] : memref<16x32xf32, #tpu.memory_space<vmem>>, vector<16x32xf32>
    tpu.vector_store %arg3[%c0_7, %c0_8], %14 {strides = array<i32>} : memref<16x32xf32, #tpu.memory_space<vmem>>, vector<16x32xf32>,
    return
  }
  func.func @transform_0(%arg0: i32) -> (i32, i32) {
    %c0_i32 = arith.constant 0 : i32
    %c0_i32_0 = arith.constant 0 : i32
    return %arg0, %c0_i32 : i32, i32
  }
  func.func @transform_1(%arg0: i32) -> (i32, i32) {
    %c0_i32 = arith.constant 0 : i32
    %c0_i32_0 = arith.constant 0 : i32
    %c0_i32_1 = arith.constant 0 : i32
    return %c0_i32, %c0_i32_0 : i32, i32
  }
  func.func @transform_2(%arg0: i32) -> (i32, i32) {
    %c0_i32 = arith.constant 0 : i32
    %c0_i32_0 = arith.constant 0 : i32
    return %arg0, %c0_i32 : i32, i32
  }
}

</mosaic_0001>

<llo_original>
// kernel: tpu_custom_call.1
$region0: #{tpu_custom_call.1}
  #allocation0 [shape = 'u32[]', space=smem, size = 0x4, offset = 0x4, fixed_abs, tag = 'smem constant byte address 0x4 - core index']
  #allocation1 [shape = 'u32[144,128]{1,0:T(1,128)}', space=vmem, size = 0x12000, scoped, tag = 'internal scratch']
  %s0 = inlined_call_operand.hbm [shape: f32[16,32], index: 0, kind: input, shape index: {}]
  %s1 = inlined_call_operand.vmem [shape: f32[1,32], index: 1, kind: input, shape index: {}]
  %s2 = inlined_call_operand.hbm [shape: f32[16,32], index: 2, kind: output, shape index: {}]
  %s3 = sld [smem:[#allocation0]]
  $region22: #{tpu_custom_call.1} parent=0
    _
  %s5 = ssub.s32 1, %s3
  %s6 = scalar_select 0, %s5, %s3
  $region1: #{tpu_custom_call.1} parent=0
    #allocation2 [shape = 'u8[8192]{0}', space=vmem, size = 0x2000, scoped, tag = 'input window, operand 0, single buffered']
    #allocation3 [shape = 's32[1]{0}', space=sflag, size = 0x4, scoped, tag = 'scoped memory for tpu_custom_call.1']
    #allocation4 [shape = 's32[1]{0}', space=sflag, size = 0x4, scoped, tag = 'scoped memory for tpu_custom_call.1']
    #allocation5 [shape = 'u8[8192]{0}', space=vmem, size = 0x2000, scoped, tag = 'output window, operand 0, single buffered']
    %7 = vsyncpa [#allocation3], 0
    %8 = vsyncpa [#allocation4], 0
    // Predicated region
    $region2: #{tpu_custom_call.1} parent=1 // pred_check
      _
    $region3: #{tpu_custom_call.1} parent=1 // pred_check_branch
      %10 = sbr.rel (0) target = $region5
    $region4: #{tpu_custom_call.1} parent=1 // pred_region
      %s12 = ssub.s32 256, 256
      %13 = vsyncadd [#allocation3], %s12
      %s14 = sshll.u32 [#allocation2], 4
      %s15 = int_to_ptr.vmem [resolvable:$true] %s14
      %20 = dma.hbm_to_vmem [thread:$0]  %s0, 256, %s15, [#allocation3], 128, 128, 8
    $region5: #{tpu_custom_call.1} parent=1 // pred_fallthru
      _
    // Predicated region
    $region6: #{tpu_custom_call.1} parent=1 // pred_check
      _
    $region7: #{tpu_custom_call.1} parent=1 // pred_check_branch
      %22 = sbr.rel (0) target = $region9
    $region8: #{tpu_custom_call.1} parent=1 // pred_region
      _
    $region9: #{tpu_custom_call.1} parent=1 // pred_fallthru
      _
    // Predicated region
    $region10: #{tpu_custom_call.1} parent=1 // pred_check
      _
    $region11: #{tpu_custom_call.1} parent=1 // pred_check_branch
      %24 = sbr.rel (0) target = $region13
    $region12: #{tpu_custom_call.1} parent=1 // pred_region
      %25 = dma.done [#allocation3], 256
    $region13: #{tpu_custom_call.1} parent=1 // pred_fallthru
      _
    %v26 = vld [vmem:[#allocation2] sm:$0xff]
    %v27 = vld [vmem:[#allocation2 + $0x8] sm:$0xff]
    %v28 = vmul.f32 %v26, %v26
    %v29 = vmul.f32 %v27, %v27
    %vm30 = vcmask 261120
    %v31 = vsel %vm30, %v28, 0.0
    %32 = vadd.xlane.f32.xlu0 %v31
    %v33 = vpop.xlane.xlu0 %32
    %v34 = vsel %vm30, %v29, 0.0
    %35 = vadd.xlane.f32.xlu0 %v34
    %v36 = vpop.xlane.xlu0 %35
    %v37 = vrcp.pop 32.0
    %v38 = vmul.f32 %v33, %v37
    %v39 = vmul.f32 %v36, %v37
    %v40 = vadd.f32 %v38, 1e-06
    %v41 = vadd.f32 %v39, 1e-06
    %v42 = vrsqrt.pop %v40
    %v43 = vrsqrt.pop %v41
    %v44 = vmul.f32 %v26, %v42
    %v45 = vmul.f32 %v27, %v43
    %v46 = vld [vmem:[%s1] sm:$0x1]
    %v48 = vlaneseq
    %v49 = vshrl.u32 %v48, 7
    %v50 = vsub.s32 0, %v49
    %v51 = vrot.slane %v46, %v50
    %v53 = vmul.f32 %v51, %v44
    %v54 = vmul.f32 %v51, %v45
    %55 = vst.msk [vmem:[#allocation5] sm:$0xff] %vm30, %v53
    %56 = vst.msk [vmem:[#allocation5 + $0x8] sm:$0xff] %vm30, %v54
    // Predicated region
    $region14: #{tpu_custom_call.1} parent=1 // pred_check
      _
    $region15: #{tpu_custom_call.1} parent=1 // pred_check_branch
      %58 = sbr.rel (0) target = $region17
    $region16: #{tpu_custom_call.1} parent=1 // pred_region
      %s60 = ssub.s32 256, 256
      %61 = vsyncadd [#allocation4], %s60
      %s62 = sshll.u32 [#allocation5], 4
      %s63 = int_to_ptr.vmem [resolvable:$true] %s62
      %68 = dma.vmem_to_hbm [thread:$0]  %s63, 256, %s2, [#allocation4], 128, 128, 8
    $region17: #{tpu_custom_call.1} parent=1 // pred_fallthru
      _
    // Predicated region
    $region18: #{tpu_custom_call.1} parent=1 // pred_check
      _
    $region19: #{tpu_custom_call.1} parent=1 // pred_check_branch
      %70 = sbr.rel (0) target = $region21
    $region20: #{tpu_custom_call.1} parent=1 // pred_region
      %71 = dma.done [#allocation4], 256
    $region21: #{tpu_custom_call.1} parent=1 // pred_fallthru
      _
    %72 = vsyncpa [#allocation3], 1
    %73 = vsyncpa [#allocation4], 1

</llo_original>
